<compile_context>
chip_gen: v5e
topology: v5e:2x2
jax: 0.10.0
libtpu: 0.0.40
codegen_flags: <defaults>
</compile_context>

<pallas_src>
import jax
import jax.numpy as jnp
from jax import lax
from jax.experimental import pallas as pl
from jax.experimental.pallas import tpu as pltpu

BN_EPS = 1e-5
LANE = 128
ROW_ALIGN = 16                       # multiple of 8 (f32) and 16 (bf16 packing)
VMEM_LIMIT = 48 * 1024 * 1024        # <= v7x's 64 MiB physical VMEM
X_TILE_BUDGET = 8 * 1024 * 1024      # per pipeline buffer for the X tile


def _round_up(x, m):
    return (x + m - 1) // m * m


def _pick_tile(total, target, align):
    """Largest multiple of `align` that divides `total` and is <= max(target, align)."""
    assert total % align == 0
    if total <= target:
        return total
    t = max(align, (target // align) * align)
    while t > align and total % t:
        t -= align
    return t


def _linear_stats_kernel(x_ref, w_ref, y_ref, stat_ref):
    """y = x @ w for one batch tile + per-tile BN partial statistics.

    The Linear bias is intentionally omitted: under training-mode BatchNorm a
    per-class constant shifts y and the batch mean identically and cancels.
    Padded rows / K-columns of x are zero, so they contribute nothing to the
    sums; the wrapper divides by the true batch size.
    """
    y = jnp.dot(x_ref[...], w_ref[...], preferred_element_type=jnp.float32)
    y_ref[...] = y.astype(y_ref.dtype)
    s = jnp.sum(y, axis=0, keepdims=True)            # (1, Cpad)
    ss = jnp.sum(y * y, axis=0, keepdims=True)       # (1, Cpad)
    stat_ref[...] = jnp.concatenate([s, ss], axis=0)[None]   # (1, 2, Cpad)


def _bn_apply_kernel(y_ref, scale_ref, shift_ref, o_ref):
    """BatchNorm folded into a single FMA: out = y * scale + shift."""
    y = y_ref[...].astype(jnp.float32)
    o_ref[...] = (y * scale_ref[...] + shift_ref[...]).astype(o_ref.dtype)


def logreg_forward(x, weight, bias, gamma, beta, *, matmul_dtype=None,
                   tb_target=512, tb2_target=2048):
    """x: (B, K), weight: (C, K), bias/gamma/beta: (C,).  Returns (B, C)."""
    del bias  # Cancels exactly under training-mode BatchNorm (see kernel doc).

    B, K = x.shape
    C = weight.shape[0]

    Cpad = _round_up(C, LANE)
    Bpad = _round_up(B, ROW_ALIGN)
    Kpad = _round_up(K, LANE)

    in_dtype = jnp.dtype(x.dtype if matmul_dtype is None else matmul_dtype)
    # f32 path keeps an exact f32 y intermediate (and can alias it as the
    # pass-2 output); the bf16 path stores y in bf16 to halve its HBM traffic.
    y_dtype = jnp.float32 if in_dtype == jnp.dtype(jnp.float32) else jnp.bfloat16
    out_dtype = x.dtype

    # ---- Pass-1 batch tile: divisor of Bpad, capped so (a) the parallel axis
    # has >= 2 tiles when possible (v7x megacore) and (b) the (tb, Kpad) X
    # block stays within the per-buffer VMEM budget.
    cap = tb_target
    if Bpad >= 2 * ROW_ALIGN:
        cap = min(cap, Bpad // 2)
    max_rows = max(8, (X_TILE_BUDGET // (Kpad * in_dtype.itemsize)) // 8 * 8)
    cap = min(cap, max_rows)
    tb = _pick_tile(Bpad, cap, 8)
    nb = Bpad // tb

    xp = jnp.pad(x, ((0, Bpad - B), (0, Kpad - K))).astype(in_dtype)
    wp = jnp.pad(weight.T, ((0, Kpad - K), (0, Cpad - C))).astype(in_dtype)
    gamma_p = jnp.pad(gamma.astype(jnp.float32), (0, Cpad - C), constant_values=1.0)
    beta_p = jnp.pad(beta.astype(jnp.float32), (0, Cpad - C))

    # ---- Pass 1: Linear (no bias) + per-batch-tile BN partial statistics.
    y, stats = pl.pallas_call(
        _linear_stats_kernel,
        out_shape=(
            jax.ShapeDtypeStruct((Bpad, Cpad), y_dtype),
            jax.ShapeDtypeStruct((nb, 2, Cpad), jnp.float32),
        ),
        grid_spec=pltpu.PrefetchScalarGridSpec(
            num_scalar_prefetch=0,
            grid=(nb,),
            in_specs=[
                pl.BlockSpec((tb, Kpad), lambda i: (i, 0)),
                pl.BlockSpec((Kpad, Cpad), lambda i: (0, 0)),   # W resident in VMEM
            ],
            out_specs=[
                pl.BlockSpec((tb, Cpad), lambda i: (i, 0)),
                pl.BlockSpec((1, 2, Cpad), lambda i: (i, 0, 0)),
            ],
        ),
        compiler_params=pltpu.CompilerParams(
            dimension_semantics=("parallel",),
            vmem_limit_bytes=VMEM_LIMIT,
        ),
    )(xp, wp)

    # ---- Tiny host-side reduction: fold BN into one scale/shift per class.
    mean = jnp.sum(stats[:, 0, :], axis=0) / B                  # (Cpad,)
    ex2 = jnp.sum(stats[:, 1, :], axis=0) / B
    var = jnp.maximum(ex2 - mean * mean, 0.0)                   # biased variance
    inv_std = lax.rsqrt(var + BN_EPS)
    scale = (gamma_p * inv_std).reshape(1, Cpad)
    shift = (beta_p - mean * gamma_p * inv_std).reshape(1, Cpad)

    # ---- Pass-2 tile: larger rows, still >= 2 tiles for v7x when possible.
    cap2 = tb2_target
    if Bpad >= 2 * ROW_ALIGN:
        cap2 = min(cap2, Bpad // 2)
    tb2 = _pick_tile(Bpad, cap2, 8)
    nb2 = Bpad // tb2

    # Alias the y buffer as the output when dtypes match (f32 / bf16-in-bf16).
    aliases = {0: 0} if jnp.dtype(y_dtype) == jnp.dtype(out_dtype) else {}

    out = pl.pallas_call(
        _bn_apply_kernel,
        out_shape=jax.ShapeDtypeStruct((Bpad, Cpad), out_dtype),
        grid_spec=pltpu.PrefetchScalarGridSpec(
            num_scalar_prefetch=0,
            grid=(nb2,),
            in_specs=[
                pl.BlockSpec((tb2, Cpad), lambda i: (i, 0)),
                pl.BlockSpec((1, Cpad), lambda i: (0, 0)),
                pl.BlockSpec((1, Cpad), lambda i: (0, 0)),
            ],
            out_specs=pl.BlockSpec((tb2, Cpad), lambda i: (i, 0)),
        ),
        compiler_params=pltpu.CompilerParams(
            dimension_semantics=("parallel",),
            vmem_limit_bytes=VMEM_LIMIT,
        ),
        input_output_aliases=aliases,
    )(y, scale, shift)

    return out[:B, :C]


def reference_forward(x, weight, bias, gamma, beta):
    y = jnp.dot(x, weight.T, precision=lax.Precision.HIGHEST) + bias
    mean = jnp.mean(y, axis=0, keepdims=True)
    var = jnp.mean((y - mean) ** 2, axis=0, keepdims=True)
    return (y - mean) / jnp.sqrt(var + BN_EPS) * gamma + beta


if __name__ == "__main__":
    # --- Test 1: module-sized toy shapes (batch=8, in_size=32, n_classes=4) --
    batch, in_size, n_classes = 8, 32, 4
    key = jax.random.PRNGKey(0)
    kx, kw, kb = jax.random.split(key, 3)

    x = jax.random.normal(kx, (batch, in_size), dtype=jnp.float32)
    bound = 1.0 / (in_size ** 0.5)
    weight = jax.random.uniform(kw, (n_classes, in_size), jnp.float32, -bound, bound)
    bias = jax.random.uniform(kb, (n_classes,), jnp.float32, -bound, bound)
    gamma = jnp.ones((n_classes,), jnp.float32)      # PyTorch BN default init
    beta = jnp.zeros((n_classes,), jnp.float32)

    out = jax.block_until_ready(logreg_forward(x, weight, bias, gamma, beta))
    ref = reference_forward(x, weight, bias, gamma, beta)
    assert out.shape == (batch, n_classes)
    assert jnp.allclose(out, ref, atol=5e-3, rtol=5e-3), "mismatch (toy, f32)"

    # --- Test 2: unaligned shapes -> multi-tile batch grid (nb >= 2) ---------
    batch2, in2, c2 = 300, 600, 10
    k2 = jax.random.PRNGKey(1)
    ka, kb2, kc, kd, ke = jax.random.split(k2, 5)
    x2 = jax.random.normal(ka, (batch2, in2), jnp.float32)
    w2 = jax.random.uniform(kb2, (c2, in2), jnp.float32, -0.1, 0.1)
    b2 = jax.random.uniform(kc, (c2,), jnp.float32, -0.1, 0.1)
    g2 = jax.random.uniform(kd, (c2,), jnp.float32, 0.5, 1.5)
    be2 = jax.random.uniform(ke, (c2,), jnp.float32, -0.5, 0.5)

    out2 = jax.block_until_ready(logreg_forward(x2, w2, b2, g2, be2))
    ref2 = reference_forward(x2, w2, b2, g2, be2)
    assert out2.shape == (batch2, c2)
    assert jnp.allclose(out2, ref2, atol=5e-3, rtol=5e-3), "mismatch (tiled, f32)"

    # --- Test 3: bf16 MXU-input path (bf16 y intermediate), loose tolerance --
    out3 = jax.block_until_ready(
        logreg_forward(x2, w2, b2, g2, be2, matmul_dtype=jnp.bfloat16))
    assert jnp.allclose(out3, ref2, atol=0.15, rtol=0.1), "mismatch (bf16)"

    print("KERNEL_OK")
</pallas_src>

<mosaic_0001>
module attributes {stable_mosaic.version = 11 : i64} {
  func.func @_linear_stats_kernel(%arg0: i32, %arg1: memref<16x128xf32, #tpu.memory_space<vmem>>, %arg2: memref<128x128xf32, #tpu.memory_space<vmem>>, %arg3: memref<16x128xf32, #tpu.memory_space<vmem>>, %arg4: memref<1x2x128xf32, #tpu.memory_space<vmem>>) attributes {dimension_semantics = [#tpu.dimension_semantics<parallel>], iteration_bounds = array<i64: 1>, scalar_prefetch = 0 : i64, scratch_operands = 0 : i64, tpu.core_type = #tpu.core_type<tc>, window_params = [{transform_indices = @transform_0, window_bounds = array<i64: 16, 128>}, {pipeline_mode = #tpu.pipeline_mode<synchronous>, transform_indices = @transform_1, window_bounds = array<i64: 128, 128>}, {transform_indices = @transform_2, window_bounds = array<i64: 16, 128>}, {transform_indices = @transform_3, window_bounds = array<i64: 1, 2, 128>}]} {
    %c0 = arith.constant 0 : index
    %c0_0 = arith.constant 0 : index
    %0 = vector.load %arg1[%c0, %c0_0] : memref<16x128xf32, #tpu.memory_space<vmem>>, vector<16x128xf32>
    %c0_1 = arith.constant 0 : index
    %c0_2 = arith.constant 0 : index
    %1 = vector.load %arg2[%c0_1, %c0_2] : memref<128x128xf32, #tpu.memory_space<vmem>>, vector<128x128xf32>
    %cst = arith.constant dense<0.000000e+00> : vector<16x128xf32>
    %2 = tpu.matmul %0, %1, %cst {dimension_numbers = #tpu.dot_dimension_numbers<[1], [0], [0], [1], [0, 0, 1, 1], [], []>} : vector<16x128xf32>, vector<128x128xf32>, vector<16x128xf32> -> vector<16x128xf32>
    %c0_3 = arith.constant 0 : index
    %c0_4 = arith.constant 0 : index
    %3 = vector.load %arg3[%c0_3, %c0_4] : memref<16x128xf32, #tpu.memory_space<vmem>>, vector<16x128xf32>
    tpu.vector_store %arg3[%c0_3, %c0_4], %2 {strides = array<i32>} : memref<16x128xf32, #tpu.memory_space<vmem>>, vector<16x128xf32>,
    %cst_5 = arith.constant dense<0.000000e+00> : vector<128xf32>
    %4 = vector.multi_reduction <add>, %2, %cst_5 [0] : vector<16x128xf32> to vector<128xf32>
    %5 = vector.shape_cast %4 : vector<128xf32> to vector<1x128xf32>
    %6 = arith.mulf %2, %2 : vector<16x128xf32>
    %cst_6 = arith.constant dense<0.000000e+00> : vector<128xf32>
    %7 = vector.multi_reduction <add>, %6, %cst_6 [0] : vector<16x128xf32> to vector<128xf32>
    %8 = vector.shape_cast %7 : vector<128xf32> to vector<1x128xf32>
    %9 = tpu.concatenate %5, %8 in 0 : vector<1x128xf32>, vector<1x128xf32> -> vector<2x128xf32>
    %10 = vector.shape_cast %9 : vector<2x128xf32> to vector<1x2x128xf32>
    %c0_7 = arith.constant 0 : index
    %c0_8 = arith.constant 0 : index
    %c0_9 = arith.constant 0 : index
    %11 = vector.load %arg4[%c0_7, %c0_8, %c0_9] : memref<1x2x128xf32, #tpu.memory_space<vmem>>, vector<1x2x128xf32>
    tpu.vector_store %arg4[%c0_7, %c0_8, %c0_9], %10 {strides = array<i32>} : memref<1x2x128xf32, #tpu.memory_space<vmem>>, vector<1x2x128xf32>,
    return
  }
  func.func @transform_0(%arg0: i32) -> (i32, i32) {
    %c0_i32 = arith.constant 0 : i32
    %c0_i32_0 = arith.constant 0 : i32
    return %arg0, %c0_i32 : i32, i32
  }
  func.func @transform_1(%arg0: i32) -> (i32, i32) {
    %c0_i32 = arith.constant 0 : i32
    %c0_i32_0 = arith.constant 0 : i32
    %c0_i32_1 = arith.constant 0 : i32
    return %c0_i32, %c0_i32_0 : i32, i32
  }
  func.func @transform_2(%arg0: i32) -> (i32, i32) {
    %c0_i32 = arith.constant 0 : i32
    %c0_i32_0 = arith.constant 0 : i32
    return %arg0, %c0_i32 : i32, i32
  }
  func.func @transform_3(%arg0: i32) -> (i32, i32, i32) {
    %c0_i32 = arith.constant 0 : i32
    %c0_i32_0 = arith.constant 0 : i32
    %c0_i32_1 = arith.constant 0 : i32
    return %arg0, %c0_i32, %c0_i32_0 : i32, i32, i32
  }
}

</mosaic_0001>

<llo_original>
// kernel: tpu_custom_call.1
$region0: #{tpu_custom_call.1}
  #allocation0 [shape = 'u32[]', space=smem, size = 0x4, offset = 0x4, fixed_abs, tag = 'smem constant byte address 0x4 - core index']
  #allocation1 [shape = 'u32[72,128]{1,0:T(1,128)}', space=vmem, size = 0x9000, scoped, tag = 'internal scratch']
  %s0 = inlined_call_operand.hbm [shape: f32[16,128], index: 0, kind: input, shape index: {}]
  %s1 = inlined_call_operand.hbm [shape: f32[128,128], index: 1, kind: input, shape index: {}]
  %s2 = inlined_call_operand.hbm [shape: f32[16,128], index: 2, kind: output, shape index: {0}]
  %s3 = inlined_call_operand.hbm [shape: f32[1,2,128], index: 3, kind: output, shape index: {1}]
  %4 = xla_tuple %s2, %s3
  %s5 = sld [smem:[#allocation0]]
  $region34: #{tpu_custom_call.1} parent=0
    _
  %s7 = ssub.s32 1, %s5
  %s8 = scalar_select 0, %s7, %s5
  $region1: #{tpu_custom_call.1} parent=0
    #allocation2 [shape = 'u8[8192]{0}', space=vmem, size = 0x2000, scoped, tag = 'input window, operand 0, single buffered']
    #allocation3 [shape = 's32[1]{0}', space=sflag, size = 0x4, scoped, tag = 'scoped memory for tpu_custom_call.1']
    #allocation4 [shape = 's32[1]{0}', space=sflag, size = 0x4, scoped, tag = 'scoped memory for tpu_custom_call.1']
    #allocation5 [shape = 'u8[65536]{0}', space=vmem, size = 0x10000, scoped, tag = 'input window, operand 1, single buffered']
    #allocation6 [shape = 's32[1]{0}', space=sflag, size = 0x4, scoped, tag = 'scoped memory for tpu_custom_call.1']
    #allocation7 [shape = 'u8[8192]{0}', space=vmem, size = 0x2000, scoped, tag = 'output window, operand 0, single buffered']
    #allocation8 [shape = 'u8[1024]{0}', space=vmem, size = 0x400, scoped, tag = 'output window, operand 1, single buffered']
    #allocation9 [shape = 's32[1]{0}', space=sflag, size = 0x4, scoped, tag = 'scoped memory for tpu_custom_call.1']
    %9 = vsyncpa [#allocation3], 0
    %10 = vsyncpa [#allocation6], 0
    %11 = vsyncpa [#allocation4], 0
    %12 = vsyncpa [#allocation9], 0
    // Predicated region
    $region2: #{tpu_custom_call.1} parent=1 // pred_check
      _
    $region3: #{tpu_custom_call.1} parent=1 // pred_check_branch
      %14 = sbr.rel (0) target = $region5
    $region4: #{tpu_custom_call.1} parent=1 // pred_region
      %16 = vsyncadd [#allocation3], 0
      %s17 = sshll.u32 %s0, 4
      %s18 = int_to_ptr.hbm [resolvable:$true] %s17
      %s19 = sshll.u32 [#allocation2], 4
      %s20 = int_to_ptr.vmem [resolvable:$true] %s19
      %25 = dma.hbm_to_vmem [thread:$0]  %s18, 256, %s20, [#allocation3], 128, 128, 8
    $region5: #{tpu_custom_call.1} parent=1 // pred_fallthru
      _
    // Predicated region
    $region6: #{tpu_custom_call.1} parent=1 // pred_check
      _
    $region7: #{tpu_custom_call.1} parent=1 // pred_check_branch
      %27 = sbr.rel (0) target = $region9
    $region8: #{tpu_custom_call.1} parent=1 // pred_region
      %29 = vsyncadd [#allocation6], 0
      %s30 = sshll.u32 %s1, 4
      %s31 = int_to_ptr.hbm [resolvable:$true] %s30
      %s32 = sshll.u32 [#allocation5], 4
      %s33 = int_to_ptr.vmem [resolvable:$true] %s32
      %38 = dma.hbm_to_vmem [thread:$0]  %s31, 2048, %s33, [#allocation6], 128, 128, 8
    $region9: #{tpu_custom_call.1} parent=1 // pred_fallthru
      _
    // Predicated region
    $region10: #{tpu_custom_call.1} parent=1 // pred_check
      _
    $region11: #{tpu_custom_call.1} parent=1 // pred_check_branch
      %40 = sbr.rel (0) target = $region13
    $region12: #{tpu_custom_call.1} parent=1 // pred_region
      %42 = dma.done [#allocation3], 256
    $region13: #{tpu_custom_call.1} parent=1 // pred_fallthru
      _
    // Predicated region
    $region14: #{tpu_custom_call.1} parent=1 // pred_check
      _
    $region15: #{tpu_custom_call.1} parent=1 // pred_check_branch
      %44 = sbr.rel (0) target = $region17
    $region16: #{tpu_custom_call.1} parent=1 // pred_region
      %46 = dma.done [#allocation6], 2048
    $region17: #{tpu_custom_call.1} parent=1 // pred_fallthru
      _
    %v47 = vld [vmem:[#allocation2] sm:$0xff]
    %v48 = vld [vmem:[#allocation2 + $0x8] sm:$0xff]
    %v49 = vld [vmem:[#allocation5] sm:$0xff]
    %v50 = vld [vmem:[#allocation5 + $0x8] sm:$0xff]
    %v51 = vld [vmem:[#allocation5 + $0x10] sm:$0xff]
    %v52 = vld [vmem:[#allocation5 + $0x18] sm:$0xff]
    %v53 = vld [vmem:[#allocation5 + $0x20] sm:$0xff]
    %v54 = vld [vmem:[#allocation5 + $0x28] sm:$0xff]
    %v55 = vld [vmem:[#allocation5 + $0x30] sm:$0xff]
    %v56 = vld [vmem:[#allocation5 + $0x38] sm:$0xff]
    %v57 = vld [vmem:[#allocation5 + $0x40] sm:$0xff]
    %v58 = vld [vmem:[#allocation5 + $0x48] sm:$0xff]
    %v59 = vld [vmem:[#allocation5 + $0x50] sm:$0xff]
    %v60 = vld [vmem:[#allocation5 + $0x58] sm:$0xff]
    %v61 = vld [vmem:[#allocation5 + $0x60] sm:$0xff]
    %v62 = vld [vmem:[#allocation5 + $0x68] sm:$0xff]
    %v63 = vld [vmem:[#allocation5 + $0x70] sm:$0xff]
    %v64 = vld [vmem:[#allocation5 + $0x78] sm:$0xff]
    %65 = vmatpush.msra.mxu0 %v64
    %66 = vmatpush.msra.mxu0 %v63
    %67 = vmatpush.msra.mxu0 %v62
    %68 = vmatpush.msra.mxu0 %v61
    %69 = vmatpush.msra.mxu0 %v60
    %70 = vmatpush.msra.mxu0 %v59
    %71 = vmatpush.msra.mxu0 %v58
    %72 = vmatpush.msra.mxu0 %v57
    %73 = vmatpush.msra.mxu0 %v56
    %74 = vmatpush.msra.mxu0 %v55
    %75 = vmatpush.msra.mxu0 %v54
    %76 = vmatpush.msra.mxu0 %v53
    %77 = vmatpush.msra.mxu0 %v52
    %78 = vmatpush.msra.mxu0 %v51
    %79 = vmatpush.msra.mxu0 %v50
    %80 = vmatpush.msra.mxu0 %v49
    %81 = vmatmul.f32.gmra.mxu0 %v47
    %v82 = vpop.f32.mrf.mxu0
    %v83 = vadd.f32 0.0, %v82
    %84 = vmatmul.f32.gmra.mxu0 %v48
    %v85 = vpop.f32.mrf.mxu0
    %v86 = vadd.f32 0.0, %v85
    %87 = vdwg.mxu0
    %88 = vst [vmem:[#allocation7] sm:$0xff] %v83
    %89 = vst [vmem:[#allocation7 + $0x8] sm:$0xff] %v86
    %v90 = vadd.f32 %v83, %v86
    %v91 = vrot.slane %v90, 4
    %v92 = vadd.f32 %v90, %v91
    %v93 = vrot.slane %v92, 2
    %v94 = vadd.f32 %v92, %v93
    %v95 = vrot.slane %v94, 1
    %v96 = vadd.f32 %v94, %v95
    %v97 = vmul.f32 %v83, %v83
    %v98 = vmul.f32 %v86, %v86
    %v99 = vadd.f32 %v97, %v98
    %v100 = vrot.slane %v99, 4
    %v101 = vadd.f32 %v99, %v100
    %v102 = vrot.slane %v101, 2
    %v103 = vadd.f32 %v101, %v102
    %v104 = vrot.slane %v103, 1
    %v105 = vadd.f32 %v103, %v104
    %vm106 = vcmask 1040384
    %v107 = vsel %vm106, %v96, %v105
    %108 = vst [vmem:[#allocation8] sm:$0x3] %v107
    // Predicated region
    $region18: #{tpu_custom_call.1} parent=1 // pred_check
      _
    $region19: #{tpu_custom_call.1} parent=1 // pred_check_branch
      %110 = sbr.rel (0) target = $region21
    $region20: #{tpu_custom_call.1} parent=1 // pred_region
      %112 = vsyncadd [#allocation4], 0
      %s113 = sshll.u32 [#allocation7], 4
      %s114 = int_to_ptr.vmem [resolvable:$true] %s113
      %s115 = sshll.u32 %s2, 4
      %s116 = int_to_ptr.hbm [resolvable:$true] %s115
      %121 = dma.vmem_to_hbm [thread:$0]  %s114, 256, %s116, [#allocation4], 128, 128, 8
    $region21: #{tpu_custom_call.1} parent=1 // pred_fallthru
      _
    // Predicated region
    $region22: #{tpu_custom_call.1} parent=1 // pred_check
      _
    $region23: #{tpu_custom_call.1} parent=1 // pred_check_branch
      %123 = sbr.rel (0) target = $region25
    $region24: #{tpu_custom_call.1} parent=1 // pred_region
      %125 = vsyncadd [#allocation9], 0
      %s127 = sshll.u32 [#allocation8], 4
      %s128 = int_to_ptr.vmem [resolvable:$true] %s127
      %s129 = sshll.u32 %s3, 4
      %s130 = int_to_ptr.hbm [resolvable:$true] %s129
      %132 = dma.vmem_to_hbm [thread:$0]  %s128, 32, %s130, [#allocation9]
    $region25: #{tpu_custom_call.1} parent=1 // pred_fallthru
      _
    // Predicated region
    $region26: #{tpu_custom_call.1} parent=1 // pred_check
      _
    $region27: #{tpu_custom_call.1} parent=1 // pred_check_branch
      %134 = sbr.rel (0) target = $region29
    $region28: #{tpu_custom_call.1} parent=1 // pred_region
      %136 = dma.done [#allocation4], 256
    $region29: #{tpu_custom_call.1} parent=1 // pred_fallthru
      _
    // Predicated region
    $region30: #{tpu_custom_call.1} parent=1 // pred_check
      _
    $region31: #{tpu_custom_call.1} parent=1 // pred_check_branch
      %138 = sbr.rel (0) target = $region33
    $region32: #{tpu_custom_call.1} parent=1 // pred_region
      %140 = dma.done [#allocation9], 32
    $region33: #{tpu_custom_call.1} parent=1 // pred_fallthru
      _
    %141 = vsyncpa [#allocation3], 1
    %142 = vsyncpa [#allocation6], 1
    %143 = vsyncpa [#allocation4], 1
    %144 = vsyncpa [#allocation9], 1

</llo_original>
